<compile_context>
chip_gen: v6e
topology: v6e:2x2x1
jax: 0.10.0
libtpu: 0.0.40
codegen_flags: <defaults>
</compile_context>

<pallas_src>
import jax
import jax.numpy as jnp
import numpy as np
from jax.experimental import pallas as pl
from jax.experimental.pallas import tpu as pltpu


# ----------------------------- kernels --------------------------------------


def _stats_kernel(x_ref, sum_ref, sumsq_ref):
    """Fused per-row sum / sum-of-squares accumulation over the (N, M) grid.

    x_ref:     (1, CF, TILE_M) input tile
    sum_ref:   (CF, 1) f32 accumulator (constant block index -> grid-resident)
    sumsq_ref: (CF, 1) f32 accumulator
    """
    @pl.when((pl.program_id(0) == 0) & (pl.program_id(1) == 0))
    def _init():
        sum_ref[...] = jnp.zeros_like(sum_ref)
        sumsq_ref[...] = jnp.zeros_like(sumsq_ref)

    x = x_ref[0].astype(jnp.float32)                       # (CF, TILE_M)
    sum_ref[...] += jnp.sum(x, axis=1, keepdims=True)
    sumsq_ref[...] += jnp.sum(x * x, axis=1, keepdims=True)


def _apply_kernel(x_ref, bias_ref, mult_ref, y_ref):
    """y = (x + bias) * mult, streamed tile by tile.

    x_ref/y_ref: (1, CF, TILE_M); bias_ref/mult_ref: (CF, 1), VMEM-resident.
    """
    x = x_ref[0].astype(jnp.float32)                       # (CF, TILE_M)
    y_ref[0] = ((x + bias_ref[...]) * mult_ref[...]).astype(y_ref.dtype)


# ------------------------- tiling heuristics --------------------------------


def _choose_fold(C, HW):
    """Fold part of HW onto sublanes when C is not a multiple of 8."""
    if C % 8 == 0:
        return 1
    for f in (2, 4, 8):
        if (C * f) % 8 == 0 and HW % f == 0 and (HW // f) % 128 == 0:
            return f
    return 1


def _choose_tile(MF, cap=2048):
    """Largest multiple-of-128 divisor of MF up to `cap` (else the full dim)."""
    if MF % 128 != 0:
        return MF          # full-extent block (always allowed)
    best = 128
    t = 256
    while t <= min(MF, cap):
        if MF % t == 0:
            best = t
        t += 128
    return best


# ----------------------------- wrapper ---------------------------------------


def actnorm_forward(x, sldj=None, *, scale=1.0, eps=1e-6):
    """ActNorm forward (non-reverse) with data-dependent initialization.

    x:    (N, C, H, W) array (NCHW, matching the PyTorch module)
    sldj: optional (N,) sum-log-det-Jacobian accumulator

    Returns (y, sldj, bias, logs); bias/logs have shape (1, C, 1, 1).
    """
    N, C, H, W = x.shape
    HW = H * W
    fold = _choose_fold(C, HW)
    CF = C * fold
    MF = HW // fold
    TILE_M = _choose_tile(MF)
    n_m_tiles = MF // TILE_M

    # Free layout change: same flat element order as NCHW, no data movement.
    xf = x.reshape(N, CF, MF)

    grid = (N, n_m_tiles)
    x_spec = pl.BlockSpec((1, CF, TILE_M), lambda n, t: (n, 0, t))
    vec_spec = pl.BlockSpec((CF, 1), lambda n, t: (0, 0))

    # ---- pass 1: fused sum / sum-of-squares (single streaming read of x) ----
    row_sum, row_sumsq = pl.pallas_call(
        _stats_kernel,
        out_shape=(
            jax.ShapeDtypeStruct((CF, 1), jnp.float32),
            jax.ShapeDtypeStruct((CF, 1), jnp.float32),
        ),
        grid_spec=pltpu.PrefetchScalarGridSpec(
            num_scalar_prefetch=0,
            grid=grid,
            in_specs=[x_spec],
            out_specs=[vec_spec, vec_spec],
        ),
        compiler_params=pltpu.CompilerParams(
            dimension_semantics=("arbitrary", "arbitrary")),
    )(xf)

    # ---- O(C) finalize in plain JAX (touches only C*fold scalars) -----------
    m_total = float(N * HW)
    ch_sum = jnp.sum(row_sum.reshape(C, fold), axis=1)      # (C,)
    ch_sumsq = jnp.sum(row_sumsq.reshape(C, fold), axis=1)  # (C,)
    mean = ch_sum / m_total
    var = jnp.maximum(ch_sumsq / m_total - mean * mean, 0.0)
    mult = scale / (jnp.sqrt(var) + eps)     # applied directly (no exp round trip)
    logs = jnp.log(mult)                     # log taken once for params / ldj
    bias = -mean
    ldj = jnp.sum(logs) * float(HW)

    bias_rows = jnp.repeat(bias, fold).reshape(CF, 1).astype(jnp.float32)
    mult_rows = jnp.repeat(mult, fold).reshape(CF, 1).astype(jnp.float32)

    # ---- pass 2: streamed apply (read x + write y) ---------------------------
    yf = pl.pallas_call(
        _apply_kernel,
        out_shape=jax.ShapeDtypeStruct((N, CF, MF), x.dtype),
        grid_spec=pltpu.PrefetchScalarGridSpec(
            num_scalar_prefetch=0,
            grid=grid,
            in_specs=[x_spec, vec_spec, vec_spec],
            out_specs=x_spec,
        ),
        compiler_params=pltpu.CompilerParams(
            dimension_semantics=("parallel", "parallel")),
    )(xf, bias_rows, mult_rows)

    y = yf.reshape(N, C, H, W)
    bias4 = bias.reshape(1, C, 1, 1)
    logs4 = logs.reshape(1, C, 1, 1)
    if sldj is not None:
        sldj = sldj + ldj
    return y, sldj, bias4, logs4


# ----------------------------- reference -------------------------------------


def _reference_forward(x, sldj, scale=1.0, eps=1e-6):
    """Pure-JAX reference mirroring the PyTorch module (conv, first call)."""
    dims = (0, 2, 3)
    bias = -jnp.mean(x, axis=dims, keepdims=True)
    v = jnp.mean((x + bias) ** 2, axis=dims, keepdims=True)
    logs = jnp.log(scale / (jnp.sqrt(v) + eps))
    y = (x + bias) * jnp.exp(logs)
    ldj = jnp.sum(logs) * x.shape[2] * x.shape[3]
    return y, sldj + ldj, bias, logs


if __name__ == "__main__":
    key = jax.random.PRNGKey(0)

    N, C, H, W = 2, 4, 16, 16
    x = jax.random.normal(key, (N, C, H, W), dtype=jnp.float32) * 2.0 + 0.5
    sldj = jnp.zeros((N,), dtype=jnp.float32)

    y, sldj_out, bias, logs = actnorm_forward(x, sldj, scale=1.0)
    jax.block_until_ready((y, sldj_out, bias, logs))

    y_ref, sldj_ref, bias_ref, logs_ref = _reference_forward(x, sldj)

    np.testing.assert_allclose(np.asarray(y), np.asarray(y_ref), rtol=2e-5, atol=2e-5)
    np.testing.assert_allclose(np.asarray(sldj_out), np.asarray(sldj_ref), rtol=2e-5, atol=2e-5)
    np.testing.assert_allclose(np.asarray(bias), np.asarray(bias_ref), rtol=2e-5, atol=2e-5)
    np.testing.assert_allclose(np.asarray(logs), np.asarray(logs_ref), rtol=2e-5, atol=2e-5)

    print("KERNEL_OK")
</pallas_src>

<mosaic_0001>
module attributes {stable_mosaic.version = 11 : i64} {
  func.func @_stats_kernel(%arg0: i32, %arg1: i32, %arg2: memref<1x8x128xf32, #tpu.memory_space<vmem>>, %arg3: memref<8x1xf32, #tpu.memory_space<vmem>>, %arg4: memref<8x1xf32, #tpu.memory_space<vmem>>) attributes {dimension_semantics = [#tpu.dimension_semantics<arbitrary>, #tpu.dimension_semantics<arbitrary>], iteration_bounds = array<i64: 2, 1>, scalar_prefetch = 0 : i64, scratch_operands = 0 : i64, tpu.core_type = #tpu.core_type<tc>, window_params = [{transform_indices = @transform_0, window_bounds = array<i64: 1, 8, 128>}, {pipeline_mode = #tpu.pipeline_mode<synchronous>, transform_indices = @transform_1, window_bounds = array<i64: 8, 1>}, {pipeline_mode = #tpu.pipeline_mode<synchronous>, transform_indices = @transform_2, window_bounds = array<i64: 8, 1>}]} {
    %c0_i32 = arith.constant 0 : i32
    %0 = arith.cmpi eq, %arg0, %c0_i32 : i32
    %c0_i32_0 = arith.constant 0 : i32
    %1 = arith.cmpi eq, %arg1, %c0_i32_0 : i32
    %2 = arith.andi %0, %1 : i1
    %3 = arith.extui %2 : i1 to i32
    %c0_i32_1 = arith.constant 0 : i32
    %4 = arith.cmpi ne, %3, %c0_i32_1 : i32
    scf.if %4 {
      %cst_13 = arith.constant 0.000000e+00 : f32
      %18 = vector.broadcast %cst_13 : f32 to vector<8x1xf32>
      %c0_14 = arith.constant 0 : index
      %c0_15 = arith.constant 0 : index
      %19 = vector.load %arg3[%c0_14, %c0_15] : memref<8x1xf32, #tpu.memory_space<vmem>>, vector<8x1xf32>
      tpu.vector_store %arg3[%c0_14, %c0_15], %18 {strides = array<i32>} : memref<8x1xf32, #tpu.memory_space<vmem>>, vector<8x1xf32>,
      %cst_16 = arith.constant 0.000000e+00 : f32
      %20 = vector.broadcast %cst_16 : f32 to vector<8x1xf32>
      %c0_17 = arith.constant 0 : index
      %c0_18 = arith.constant 0 : index
      %21 = vector.load %arg4[%c0_17, %c0_18] : memref<8x1xf32, #tpu.memory_space<vmem>>, vector<8x1xf32>
      tpu.vector_store %arg4[%c0_17, %c0_18], %20 {strides = array<i32>} : memref<8x1xf32, #tpu.memory_space<vmem>>, vector<8x1xf32>,
    } else {
    }
    %c0 = arith.constant 0 : index
    %c0_2 = arith.constant 0 : index
    %c0_3 = arith.constant 0 : index
    %5 = vector.load %arg2[%c0, %c0_2, %c0_3] : memref<1x8x128xf32, #tpu.memory_space<vmem>>, vector<1x8x128xf32>
    %6 = vector.shape_cast %5 : vector<1x8x128xf32> to vector<8x128xf32>
    %c0_4 = arith.constant 0 : index
    %c0_5 = arith.constant 0 : index
    %7 = vector.load %arg3[%c0_4, %c0_5] : memref<8x1xf32, #tpu.memory_space<vmem>>, vector<8x1xf32>
    %cst = arith.constant dense<0.000000e+00> : vector<8xf32>
    %8 = vector.multi_reduction <add>, %6, %cst [1] : vector<8x128xf32> to vector<8xf32>
    %9 = vector.shape_cast %8 : vector<8xf32> to vector<8x1xf32>
    %10 = arith.addf %7, %9 : vector<8x1xf32>
    %c0_6 = arith.constant 0 : index
    %c0_7 = arith.constant 0 : index
    %11 = vector.load %arg3[%c0_6, %c0_7] : memref<8x1xf32, #tpu.memory_space<vmem>>, vector<8x1xf32>
    tpu.vector_store %arg3[%c0_6, %c0_7], %10 {strides = array<i32>} : memref<8x1xf32, #tpu.memory_space<vmem>>, vector<8x1xf32>,
    %c0_8 = arith.constant 0 : index
    %c0_9 = arith.constant 0 : index
    %12 = vector.load %arg4[%c0_8, %c0_9] : memref<8x1xf32, #tpu.memory_space<vmem>>, vector<8x1xf32>
    %13 = arith.mulf %6, %6 : vector<8x128xf32>
    %cst_10 = arith.constant dense<0.000000e+00> : vector<8xf32>
    %14 = vector.multi_reduction <add>, %13, %cst_10 [1] : vector<8x128xf32> to vector<8xf32>
    %15 = vector.shape_cast %14 : vector<8xf32> to vector<8x1xf32>
    %16 = arith.addf %12, %15 : vector<8x1xf32>
    %c0_11 = arith.constant 0 : index
    %c0_12 = arith.constant 0 : index
    %17 = vector.load %arg4[%c0_11, %c0_12] : memref<8x1xf32, #tpu.memory_space<vmem>>, vector<8x1xf32>
    tpu.vector_store %arg4[%c0_11, %c0_12], %16 {strides = array<i32>} : memref<8x1xf32, #tpu.memory_space<vmem>>, vector<8x1xf32>,
    return
  }
  func.func @transform_0(%arg0: i32, %arg1: i32) -> (i32, i32, i32) {
    %c0_i32 = arith.constant 0 : i32
    %c0_i32_0 = arith.constant 0 : i32
    return %arg0, %c0_i32, %arg1 : i32, i32, i32
  }
  func.func @transform_1(%arg0: i32, %arg1: i32) -> (i32, i32) {
    %c0_i32 = arith.constant 0 : i32
    %c0_i32_0 = arith.constant 0 : i32
    %c0_i32_1 = arith.constant 0 : i32
    return %c0_i32, %c0_i32_0 : i32, i32
  }
  func.func @transform_2(%arg0: i32, %arg1: i32) -> (i32, i32) {
    %c0_i32 = arith.constant 0 : i32
    %c0_i32_0 = arith.constant 0 : i32
    %c0_i32_1 = arith.constant 0 : i32
    return %c0_i32, %c0_i32_0 : i32, i32
  }
}

</mosaic_0001>

<llo_original>
// kernel: tpu_custom_call.1
$region0: #{tpu_custom_call.1}
  #allocation0 [shape = 'u32[]', space=smem, size = 0x4, offset = 0x4, fixed_abs, tag = 'smem constant byte address 0x4 - core index']
  #allocation1 [shape = 'u32[144,128]{1,0:T(1,128)}', space=vmem, size = 0x12000, scoped, tag = 'internal scratch']
  %s0 = inlined_call_operand.hbm [shape: f32[2,8,128], index: 0, kind: input, shape index: {}]
  %s1 = inlined_call_operand.vmem [shape: f32[8,1], index: 1, kind: output, shape index: {0}]
  %s2 = inlined_call_operand.vmem [shape: f32[8,1], index: 2, kind: output, shape index: {1}]
  %3 = xla_tuple %s1, %s2
  %s4 = sld [smem:[#allocation0]]
  $region53: #{tpu_custom_call.1} parent=0
    _
  %s6 = ssub.s32 1, %s4
  %s7 = scalar_select 0, %s6, %s4
  $region1: #{tpu_custom_call.1} parent=0
    #allocation2 [shape = 'u8[8192]{0}', space=vmem, size = 0x2000, scoped, tag = 'input window, operand 0']
    #allocation3 [shape = 's32[2]{0}', space=sflag, size = 0x8, scoped, tag = 'scoped memory for tpu_custom_call.1']
    %8 = vsyncpa [#allocation3], 0
    %s9 = scalar_lea.sflag [#allocation3], 1
    %10 = vsyncpa %s9, 0
    loop: start=0, step=1, limit=4
    $region2: #{tpu_custom_call.1} parent=1 // loop_pre_header
      _
    $region3: #{tpu_custom_call.1} parent=1 // loop_header
      %s12 = sphi 0, %s16
      %p13 = scmp.ge.s32.totalorder %s12, 4
      %s19 = sphi 0, %s31
      %s20 = sphi 0, %s27
      %s21 = sphi 0, %s19
      %s22 = sphi 0, %s20
      %s23 = sphi 0, %s21
      %s24 = sphi 0, %s22
      %s36 = sphi 0, %s38
      %s39 = sphi 0, %s36
      %s40 = sphi 0, %s39
      %s56 = sphi 0, %s40
      %s60 = sphi 0, %s60
      %s62 = sphi 0, %s60
      %s63 = sphi 0, %s62
      %s77 = sphi 0, %s63
      %s81 = sphi 0, %s81
      %s83 = sphi 0, %s81
      %s84 = sphi 0, %s83
      %s98 = sphi 0, %s84
    $region4: #{tpu_custom_call.1} parent=1 // loop_header_branch
      %15 = sbr.rel (%p13) target = $region8
    $region5: #{tpu_custom_call.1} parent=1 // loop_body
      %s17 = ssub.s32 %s12, 1
      %s18 = ssub.s32 %s12, 2
      %s25 = sadd.s32 1, %s20
      %p26 = scmp.ge.s32.totalorder %s25, 1
      %s27 = scalar_select %p26, 0, %s25
      %s28 = sadd.s32 1, %s19
      %s29 = scalar_select %p26, %s28, %s19
      %p30 = scmp.ge.s32.totalorder %s29, 2
      %s31 = scalar_select %p30, 0, %s29
      %s32 = ssub.s32 %s19, %s31
      %s33 = ssub.s32 %s20, %s27
      %s34 = sor.u32 %s32, %s33
      %p35 = scmp.eq.s32.totalorder %s34, 0
      %s37 = sadd.s32 %s36, 1
      %s38 = scalar_select %p35, %s36, %s37
      %p41 = pneg %p35
      %p42 = scmp.eq.s32.totalorder %s12, 1
      %p43 = por %p41, %p42
      %p44 = scmp.ne.s32.totalorder %s36, %s39
      %p45 = scmp.eq.s32.totalorder %s12, 0
      %p46 = por %p44, %p45
      %p47 = scmp.ne.s32.totalorder %s36, %s39
      %p48 = scmp.eq.s32.totalorder %s17, 1
      %p49 = por %p47, %p48
      %p50 = scmp.ne.s32.totalorder %s39, %s40
      %p51 = scmp.eq.s32.totalorder %s17, 0
      %p52 = por %p50, %p51
      %p53 = scmp.ne.s32.totalorder %s39, %s40
      %p54 = scmp.eq.s32.totalorder %s18, 1
      %p55 = por %p53, %p54
      %p57 = scmp.ne.s32.totalorder %s40, %s56
      %p58 = scmp.eq.s32.totalorder %s18, 0
      %p59 = por %p57, %p58
      %s61 = sadd.s32 %s60, 1
      %p64 = scmp.eq.s32.totalorder %s12, 1
      %p65 = scmp.ne.s32.totalorder %s60, %s62
      %p66 = scmp.eq.s32.totalorder %s12, 0
      %p67 = por %p65, %p66
      %p68 = scmp.ne.s32.totalorder %s60, %s62
      %p69 = scmp.eq.s32.totalorder %s17, 1
      %p70 = por %p68, %p69
      %p71 = scmp.ne.s32.totalorder %s62, %s63
      %p72 = scmp.eq.s32.totalorder %s17, 0
      %p73 = por %p71, %p72
      %p74 = scmp.ne.s32.totalorder %s62, %s63
      %p75 = scmp.eq.s32.totalorder %s18, 1
      %p76 = por %p74, %p75
      %p78 = scmp.ne.s32.totalorder %s63, %s77
      %p79 = scmp.eq.s32.totalorder %s18, 0
      %p80 = por %p78, %p79
      %s82 = sadd.s32 %s81, 1
      %p85 = scmp.eq.s32.totalorder %s12, 1
      %p86 = scmp.ne.s32.totalorder %s81, %s83
      %p87 = scmp.eq.s32.totalorder %s12, 0
      %p88 = por %p86, %p87
      %p89 = scmp.ne.s32.totalorder %s81, %s83
      %p90 = scmp.eq.s32.totalorder %s17, 1
      %p91 = por %p89, %p90
      %p92 = scmp.ne.s32.totalorder %s83, %s84
      %p93 = scmp.eq.s32.totalorder %s17, 0
      %p94 = por %p92, %p93
      %p95 = scmp.ne.s32.totalorder %s83, %s84
      %p96 = scmp.eq.s32.totalorder %s18, 1
      %p97 = por %p95, %p96
      %p99 = scmp.ne.s32.totalorder %s84, %s98
      %p100 = scmp.eq.s32.totalorder %s18, 0
      %p101 = por %p99, %p100
      %p102 = scmp.le.s32.totalorder 1, %s12
      %p103 = scmp.lt.s32.totalorder %s12, 3
      %p104 = pnand %p102, %p103
      %p105 = pneg %p104
      // Predicated region
      $region9: #{tpu_custom_call.1} parent=5 // pred_check
        _
      $region10: #{tpu_custom_call.1} parent=5 // pred_check_branch
        %107 = sbr.rel (%p104) target = $region12
      $region11: #{tpu_custom_call.1} parent=5 // pred_region
        %s108 = ssub.s32 %s12, 1
      $region12: #{tpu_custom_call.1} parent=5 // pred_fallthru
        _
      %p109 = scmp.lt.s32.totalorder %s12, 2
      // Predicated region
      $region13: #{tpu_custom_call.1} parent=5 // pred_check
        %p110 = pneg %p109
      $region14: #{tpu_custom_call.1} parent=5 // pred_check_branch
        %112 = sbr.rel (%p110) target = $region16
      $region15: #{tpu_custom_call.1} parent=5 // pred_region
        // Predicated region
        $region17: #{tpu_custom_call.1} parent=15 // pred_check
          %p113 = pneg %p46
        $region18: #{tpu_custom_call.1} parent=15 // pred_check_branch
          %115 = sbr.rel (%p113) target = $region20
        $region19: #{tpu_custom_call.1} parent=15 // pred_region
          %s116 = sand.u32 %s36, 1
          %s117 = scalar_lea.sflag [#allocation3], %s116
          %s118 = sand.u32 %s36, 1
          %s119 = smul.addr %s118, 8
          %s120 = scalar_lea.vmem [#allocation2], %s119
          %s122 = ssub.s32 128, 128
          %123 = vsyncadd %s117, %s122
          %s124 = sadd.s32 %s20, %s19
          %s125 = smul.addr %s124, 128
          %s126 = scalar_lea.hbm %s0, %s125
          %s128 = sshll.u32 %s120, 4
          %s129 = int_to_ptr.vmem [resolvable:$true] %s128
          %131 = dma.hbm_to_vmem [thread:$0]  %s126, 128, %s129, %s117
        $region20: #{tpu_custom_call.1} parent=15 // pred_fallthru
          _
      $region16: #{tpu_custom_call.1} parent=5 // pred_fallthru
        _
      %p132 = scmp.le.s32.totalorder 1, %s12
      %p133 = scmp.lt.s32.totalorder %s12, 3
      %p134 = pnand %p132, %p133
      %p135 = pneg %p134
      // Predicated region
      $region21: #{tpu_custom_call.1} parent=5 // pred_check
        _
      $region22: #{tpu_custom_call.1} parent=5 // pred_check_branch
        %137 = sbr.rel (%p134) target = $region24
      $region23: #{tpu_custom_call.1} parent=5 // pred_region
        %s138 = ssub.s32 %s12, 1
        %s139 = sand.u32 %s39, 1
        %s140 = scalar_lea.sflag [#allocation3], %s139
        %s141 = sand.u32 %s39, 1
        %s142 = smul.addr %s141, 8
        %s143 = scalar_lea.vmem [#allocation2], %s142
        // Predicated region
        $region25: #{tpu_custom_call.1} parent=23 // pred_check
          %p144 = pneg %p52
        $region26: #{tpu_custom_call.1} parent=23 // pred_check_branch
          %146 = sbr.rel (%p144) target = $region28
        $region27: #{tpu_custom_call.1} parent=23 // pred_region
          %147 = dma.done %s140, 128
        $region28: #{tpu_custom_call.1} parent=23 // pred_fallthru
          _
        %s148 = sand.u32 %s39, 1
        %s149 = scalar_lea.sflag [#allocation3], %s148
        %s150 = sand.u32 %s39, 1
        %s151 = smul.addr %s150, 8
        %s152 = scalar_lea.vmem [#allocation2], %s151
        %p153 = pneg %p52
        %p154 = pneg %p49
        %p155 = pneg %p73
        %p156 = pneg %p70
        %p157 = pneg %p94
        %p158 = pneg %p91
        %p159 = scmp.eq.s32.totalorder %s21, 0
        %p160 = scmp.eq.s32.totalorder %s22, 0
        %p161 = pnand %p159, %p160
        %p162 = pneg %p161
        // Predicated region
        $region29: #{tpu_custom_call.1} parent=23 // pred_check
          _
        $region30: #{tpu_custom_call.1} parent=23 // pred_check_branch
          %164 = sbr.rel (%p161) target = $region32
        $region31: #{tpu_custom_call.1} parent=23 // pred_region
          %vm165 = vcmask 7168
          %166 = vst.msk [vmem:[%s1] sm:$0xff] %vm165, 0.0
          %167 = vst.msk [vmem:[%s2] sm:$0xff] %vm165, 0.0
        $region32: #{tpu_custom_call.1} parent=23 // pred_fallthru
          _
        %v168 = vld [vmem:[%s143] sm:$0xff]
        %v169 = vld [vmem:[%s1] sm:$0xff]
        %170 = vadd.xlane.f32.xlu0 %v168
        %v171 = vpop.xlane.xlu0 %170
        %v172 = vadd.f32 %v169, %v171
        %vm173 = vcmask 7168
        %174 = vst.msk [vmem:[%s1] sm:$0xff] %vm173, %v172
        %v175 = vld [vmem:[%s2] sm:$0xff]
        %v176 = vmul.f32 %v168, %v168
        %177 = vadd.xlane.f32.xlu0 %v176
        %v178 = vpop.xlane.xlu0 %177
        %v179 = vadd.f32 %v175, %v178
        %180 = vst.msk [vmem:[%s2] sm:$0xff] %vm173, %v179
        // Predicated region
        $region33: #{tpu_custom_call.1} parent=23 // pred_check
          %p181 = pneg %p70
        $region34: #{tpu_custom_call.1} parent=23 // pred_check_branch
          %183 = sbr.rel (%p181) target = $region36
        $region35: #{tpu_custom_call.1} parent=23 // pred_region
          _
        $region36: #{tpu_custom_call.1} parent=23 // pred_fallthru
          _
        // Predicated region
        $region37: #{tpu_custom_call.1} parent=23 // pred_check
          %p184 = pneg %p91
        $region38: #{tpu_custom_call.1} parent=23 // pred_check_branch
          %186 = sbr.rel (%p184) target = $region40
        $region39: #{tpu_custom_call.1} parent=23 // pred_region
          _
        $region40: #{tpu_custom_call.1} parent=23 // pred_fallthru
          _
        // Predicated region
        $region41: #{tpu_custom_call.1} parent=23 // pred_check
          %p187 = pneg %p70
        $region42: #{tpu_custom_call.1} parent=23 // pred_check_branch
          %189 = sbr.rel (%p187) target = $region44
        $region43: #{tpu_custom_call.1} parent=23 // pred_region
          _
        $region44: #{tpu_custom_call.1} parent=23 // pred_fallthru
          _
        // Predicated region
        $region45: #{tpu_custom_call.1} parent=23 // pred_check
          %p190 = pneg %p91
        $region46: #{tpu_custom_call.1} parent=23 // pred_check_branch
          %192 = sbr.rel (%p190) target = $region48
        $region47: #{tpu_custom_call.1} parent=23 // pred_region
          _
        $region48: #{tpu_custom_call.1} parent=23 // pred_fallthru
          _
      $region24: #{tpu_custom_call.1} parent=5 // pred_fallthru
        _
      %p193 = scmp.le.s32.totalorder 2, %s12
      // Predicated region
      $region49: #{tpu_custom_call.1} parent=5 // pred_check
        %p194 = pneg %p193
      $region50: #{tpu_custom_call.1} parent=5 // pred_check_branch
        %196 = sbr.rel (%p194) target = $region52
      $region51: #{tpu_custom_call.1} parent=5 // pred_region
        %s197 = ssub.s32 %s12, 2
      $region52: #{tpu_custom_call.1} parent=5 // pred_fallthru
        _
    $region6: #{tpu_custom_call.1} parent=1 // loop_footer
      %s16 = sadd.s32 1, %s12
    $region7: #{tpu_custom_call.1} parent=1 // loop_footer_branch
      %11 = sbr.rel target = $region3
    $region8: #{tpu_custom_call.1} parent=1 // loop_exit
      _
    %198 = vsyncpa [#allocation3], 1
    %s199 = scalar_lea.sflag [#allocation3], 1
    %200 = vsyncpa %s199, 1

</llo_original>
